<compile_context>
chip_gen: v7x
topology: tpu7x:2x2x1
jax: 0.10.0
libtpu: 0.0.40
codegen_flags: <defaults>
</compile_context>

<pallas_src>
import functools

import jax
import jax.numpy as jnp
from jax import lax
from jax.experimental import pallas as pl
from jax.experimental.pallas import tpu as pltpu

# config.alpha is not available in this synthetic setting; use the common
# focal-loss default.
ALPHA = 0.25
GAMMA = 2.0

_LANES = 128
_SUBLANES = 8
_ELEMS_PER_ROW = _SUBLANES * _LANES            # 1024 elems = one (8,128) vreg
# Super-rows per block: 1024 x 8 x 128 x 4 B = 4 MiB per input block.
# 2 inputs x 2 pipeline buffers x 4 MiB = 16 MiB of VMEM.
_MAX_SUPER_ROWS_PER_BLOCK = 1024
_VMEM_LIMIT_BYTES = 32 * 1024 * 1024


def _ceil_div(a, b):
    return -(-a // b)


def _focal_loss_kernel(p_ref, y_ref, out_ref, *, alpha, gamma, rows, sup_tile,
                       mask_tail):
    k = pl.program_id(0)

    # Zero the resident (8,128) output accumulator on the first step.
    @pl.when(k == 0)
    def _():
        out_ref[...] = jnp.zeros_like(out_ref)

    p = p_ref[...].astype(jnp.float32)
    # Compare labels in their native dtype (no f32 convert pass).
    is_pos = y_ref[...] == 1

    # Fold the CE negation into alpha_t:
    #   loss = alpha_t * (1-pt)^g * (-log pt) = neg_alpha_t * (1-pt)^g * log pt
    neg_alpha_t = jnp.where(is_pos, jnp.float32(-alpha), jnp.float32(alpha - 1.0))
    # pt = p if label == 1 else 1 - p.  For hard 0/1 labels (the reference's
    # implicit assumption via its `label == 1` selects) the two-term BCE
    # collapses to -log(pt): one EUP log per element.
    pt = jnp.where(is_pos, p, 1.0 - p)
    one_minus_pt = 1.0 - pt
    if gamma == 2.0:
        focal_weight = one_minus_pt * one_minus_pt          # plain multiply
    else:
        focal_weight = jnp.power(one_minus_pt, jnp.float32(gamma))
    loss = neg_alpha_t * focal_weight * jnp.log(pt)

    if mask_tail:
        last = pl.num_programs(0) - 1

        # Steady-state tiles: straight vreg-fold, no masking work at all.
        @pl.when(k < last)
        def _():
            out_ref[...] += jnp.sum(loss, axis=0)

        # Only the final (partial) tile pays for the row mask.  Its
        # out-of-bounds super-rows hold garbage; mask the fully-computed loss
        # (never sum pre-mask) so NaN/Inf garbage is selected away.
        @pl.when(k == last)
        def _():
            row_ids = lax.broadcasted_iota(jnp.int32, loss.shape, 0)
            valid = row_ids < (rows - k * sup_tile)
            out_ref[...] += jnp.sum(jnp.where(valid, loss, 0.0), axis=0)
    else:
        out_ref[...] += jnp.sum(loss, axis=0)


def focal_loss_v1(logits, label, *, alpha=ALPHA, gamma=GAMMA, reduction="mean"):
    """Pallas TPU focal loss.  `logits` are probabilities in (0, 1).

    Note: assumes hard {0,1} labels (same as the reference's `label == 1`
    selects); soft labels would need the full two-term BCE.
    """
    assert logits.shape == label.shape
    if reduction not in ("mean", "sum"):
        # TODO(synk): reduction='none' would return the per-element loss map.
        raise NotImplementedError("only 'mean'/'sum' reductions implemented")

    total_n = int(logits.size)
    p_flat = logits.reshape(-1)
    y_flat = label.reshape(-1)

    rem = total_n % _ELEMS_PER_ROW
    if rem:
        # TODO(synk): this fallback materializes a padded copy (extra HBM
        # traffic); it only triggers when the element count is not a multiple
        # of 1024.  Padding with p=1, label=1 gives pt=1, (1-pt)^g=0, log(pt)=0
        # => exactly zero loss contribution, so no element-level mask needed.
        pad = _ELEMS_PER_ROW - rem
        p_flat = jnp.pad(p_flat, (0, pad), constant_values=1.0)
        y_flat = jnp.pad(y_flat, (0, pad), constant_values=1)

    rows = p_flat.size // _ELEMS_PER_ROW
    p3 = p_flat.reshape(rows, _SUBLANES, _LANES)   # free bitcast (contiguous)
    y3 = y_flat.reshape(rows, _SUBLANES, _LANES)

    sup_tile = min(_MAX_SUPER_ROWS_PER_BLOCK, rows)
    n_tiles = _ceil_div(rows, sup_tile)
    mask_tail = (rows % sup_tile) != 0             # only the last tile is partial

    kernel = functools.partial(
        _focal_loss_kernel, alpha=float(alpha), gamma=float(gamma),
        rows=rows, sup_tile=sup_tile, mask_tail=mask_tail)

    partial = pl.pallas_call(
        kernel,
        out_shape=jax.ShapeDtypeStruct((_SUBLANES, _LANES), jnp.float32),
        grid_spec=pltpu.PrefetchScalarGridSpec(
            num_scalar_prefetch=0,
            grid=(n_tiles,),
            in_specs=[
                pl.BlockSpec((sup_tile, _SUBLANES, _LANES),
                             lambda k: (k, 0, 0)),
                pl.BlockSpec((sup_tile, _SUBLANES, _LANES),
                             lambda k: (k, 0, 0)),
            ],
            out_specs=pl.BlockSpec((_SUBLANES, _LANES), lambda k: (0, 0)),
        ),
        compiler_params=pltpu.CompilerParams(
            dimension_semantics=("arbitrary",),
            vmem_limit_bytes=_VMEM_LIMIT_BYTES),
    )(p3, y3)

    # Single final cross-lane reduce over the tiny lane-dense partial-sum vreg.
    total = jnp.sum(partial)
    if reduction == "mean":
        return total / jnp.float32(total_n)
    return total


def _focal_loss_ref(logits, label, alpha=ALPHA, gamma=GAMMA):
    # Reference matching the PyTorch module (two-term BCE form).
    alpha_t = jnp.where(label == 1.0, alpha, 1.0 - alpha)
    ce = -(label * jnp.log(logits)) - (1.0 - label) * jnp.log(1.0 - logits)
    pt = jnp.where(label == 1.0, logits, 1.0 - logits)
    loss = alpha_t * (1.0 - pt) ** gamma * ce
    return loss.mean()


if __name__ == "__main__":
    key = jax.random.PRNGKey(0)
    k1, k2 = jax.random.split(key)

    # Small NCHW-shaped inputs: batch=2, channels=4, spatial=16x16.
    shape = (2, 4, 16, 16)
    # logits must be probabilities in (0, 1) since the loss takes log(logits).
    logits = jax.nn.sigmoid(jax.random.normal(k1, shape, dtype=jnp.float32))
    label = jax.random.bernoulli(k2, 0.3, shape).astype(jnp.float32)

    out = focal_loss_v1(logits, label)
    out = jax.block_until_ready(out)

    ref = _focal_loss_ref(logits, label)
    assert jnp.allclose(out, ref, rtol=2e-5, atol=1e-6), (out, ref)
    print("KERNEL_OK")
</pallas_src>

<mosaic_0001>
module attributes {stable_mosaic.version = 11 : i64} {
  func.func @_focal_loss_kernel(%arg0: i32, %arg1: memref<2x8x128xf32, #tpu.memory_space<vmem>>, %arg2: memref<2x8x128xf32, #tpu.memory_space<vmem>>, %arg3: memref<8x128xf32, #tpu.memory_space<vmem>>) attributes {dimension_semantics = [#tpu.dimension_semantics<arbitrary>], iteration_bounds = array<i64: 1>, scalar_prefetch = 0 : i64, scratch_operands = 0 : i64, tpu.core_type = #tpu.core_type<tc>, window_params = [{transform_indices = @transform_0, window_bounds = array<i64: 2, 8, 128>}, {transform_indices = @transform_1, window_bounds = array<i64: 2, 8, 128>}, {pipeline_mode = #tpu.pipeline_mode<synchronous>, transform_indices = @transform_2, window_bounds = array<i64: 8, 128>}]} {
    %c0_i32 = arith.constant 0 : i32
    %0 = arith.cmpi eq, %arg0, %c0_i32 : i32
    %1 = arith.extui %0 : i1 to i32
    %c0_i32_0 = arith.constant 0 : i32
    %2 = arith.cmpi ne, %1, %c0_i32_0 : i32
    scf.if %2 {
      %cst_15 = arith.constant 0.000000e+00 : f32
      %23 = vector.broadcast %cst_15 : f32 to vector<8x128xf32>
      %c0_16 = arith.constant 0 : index
      %c0_17 = arith.constant 0 : index
      %24 = vector.load %arg3[%c0_16, %c0_17] : memref<8x128xf32, #tpu.memory_space<vmem>>, vector<8x128xf32>
      tpu.vector_store %arg3[%c0_16, %c0_17], %23 {strides = array<i32>} : memref<8x128xf32, #tpu.memory_space<vmem>>, vector<8x128xf32>,
    } else {
    }
    %c0 = arith.constant 0 : index
    %c0_1 = arith.constant 0 : index
    %c0_2 = arith.constant 0 : index
    %3 = vector.load %arg1[%c0, %c0_1, %c0_2] : memref<2x8x128xf32, #tpu.memory_space<vmem>>, vector<2x8x128xf32>
    %c0_3 = arith.constant 0 : index
    %c0_4 = arith.constant 0 : index
    %c0_5 = arith.constant 0 : index
    %4 = vector.load %arg2[%c0_3, %c0_4, %c0_5] : memref<2x8x128xf32, #tpu.memory_space<vmem>>, vector<2x8x128xf32>
    %cst = arith.constant 1.000000e+00 : f32
    %5 = vector.broadcast %cst : f32 to vector<2x8x128xf32>
    %6 = arith.cmpf oeq, %4, %5 : vector<2x8x128xf32>
    %cst_6 = arith.constant -2.500000e-01 : f32
    %cst_7 = arith.constant -7.500000e-01 : f32
    %7 = vector.broadcast %cst_6 : f32 to vector<2x8x128xf32>
    %8 = vector.broadcast %cst_7 : f32 to vector<2x8x128xf32>
    %9 = arith.select %6, %7, %8 : vector<2x8x128xi1>, vector<2x8x128xf32>
    %cst_8 = arith.constant 1.000000e+00 : f32
    %10 = vector.broadcast %cst_8 : f32 to vector<2x8x128xf32>
    %11 = arith.subf %10, %3 : vector<2x8x128xf32>
    %12 = arith.select %6, %3, %11 : vector<2x8x128xi1>, vector<2x8x128xf32>
    %cst_9 = arith.constant 1.000000e+00 : f32
    %13 = vector.broadcast %cst_9 : f32 to vector<2x8x128xf32>
    %14 = arith.subf %13, %12 : vector<2x8x128xf32>
    %15 = arith.mulf %14, %14 : vector<2x8x128xf32>
    %16 = arith.mulf %9, %15 : vector<2x8x128xf32>
    %17 = math.log %12 : vector<2x8x128xf32>
    %18 = arith.mulf %16, %17 : vector<2x8x128xf32>
    %c0_10 = arith.constant 0 : index
    %c0_11 = arith.constant 0 : index
    %19 = vector.load %arg3[%c0_10, %c0_11] : memref<8x128xf32, #tpu.memory_space<vmem>>, vector<8x128xf32>
    %cst_12 = arith.constant dense<0.000000e+00> : vector<8x128xf32>
    %20 = vector.multi_reduction <add>, %18, %cst_12 [0] : vector<2x8x128xf32> to vector<8x128xf32>
    %21 = arith.addf %19, %20 : vector<8x128xf32>
    %c0_13 = arith.constant 0 : index
    %c0_14 = arith.constant 0 : index
    %22 = vector.load %arg3[%c0_13, %c0_14] : memref<8x128xf32, #tpu.memory_space<vmem>>, vector<8x128xf32>
    tpu.vector_store %arg3[%c0_13, %c0_14], %21 {strides = array<i32>} : memref<8x128xf32, #tpu.memory_space<vmem>>, vector<8x128xf32>,
    return
  }
  func.func @transform_0(%arg0: i32) -> (i32, i32, i32) {
    %c0_i32 = arith.constant 0 : i32
    %c0_i32_0 = arith.constant 0 : i32
    %c0_i32_1 = arith.constant 0 : i32
    return %arg0, %c0_i32, %c0_i32_0 : i32, i32, i32
  }
  func.func @transform_1(%arg0: i32) -> (i32, i32, i32) {
    %c0_i32 = arith.constant 0 : i32
    %c0_i32_0 = arith.constant 0 : i32
    %c0_i32_1 = arith.constant 0 : i32
    return %arg0, %c0_i32, %c0_i32_0 : i32, i32, i32
  }
  func.func @transform_2(%arg0: i32) -> (i32, i32) {
    %c0_i32 = arith.constant 0 : i32
    %c0_i32_0 = arith.constant 0 : i32
    %c0_i32_1 = arith.constant 0 : i32
    return %c0_i32, %c0_i32_0 : i32, i32
  }
}

</mosaic_0001>

<llo_original>
// kernel: tpu_custom_call.1
$region0: #{tpu_custom_call.1}
  #allocation0 [shape = 'u32[]', space=smem, size = 0x4, offset = 0x4, fixed_abs, tag = 'smem constant byte address 0x4 - core index']
  #allocation1 [shape = 'u32[144,128]{1,0:T(1,128)}', space=vmem, size = 0x12000, scoped, tag = 'internal scratch']
  %s0 = inlined_call_operand.hbm [shape: f32[2,8,128], index: 0, kind: input, shape index: {}]
  %s1 = inlined_call_operand.hbm [shape: f32[2,8,128], index: 1, kind: input, shape index: {}]
  %s2 = inlined_call_operand.hbm [shape: f32[8,128], index: 2, kind: output, shape index: {}]
  %s3 = sld [smem:[#allocation0]]
  $region30: #{tpu_custom_call.1} parent=0
    _
  %s5 = ssub.s32 1, %s3
  %s6 = scalar_select 0, %s5, %s3
  $region1: #{tpu_custom_call.1} parent=0
    #allocation2 [shape = 'u8[8192]{0}', space=vmem, size = 0x2000, scoped, tag = 'input window, operand 0, single buffered']
    #allocation3 [shape = 's32[1]{0}', space=sflag, size = 0x4, scoped, tag = 'scoped memory for tpu_custom_call.1']
    #allocation4 [shape = 's32[1]{0}', space=sflag, size = 0x4, scoped, tag = 'scoped memory for tpu_custom_call.1']
    #allocation5 [shape = 'u8[8192]{0}', space=vmem, size = 0x2000, scoped, tag = 'input window, operand 1, single buffered']
    #allocation6 [shape = 's32[1]{0}', space=sflag, size = 0x4, scoped, tag = 'scoped memory for tpu_custom_call.1']
    #allocation7 [shape = 'u8[4096]{0}', space=vmem, size = 0x1000, scoped, tag = 'output window, operand 0, single buffered']
    %7 = vsyncpa [#allocation3], 0
    %8 = vsyncpa [#allocation6], 0
    %9 = vsyncpa [#allocation4], 0
    // Predicated region
    $region2: #{tpu_custom_call.1} parent=1 // pred_check
      _
    $region3: #{tpu_custom_call.1} parent=1 // pred_check_branch
      %11 = sbr.rel (0) target = $region5
    $region4: #{tpu_custom_call.1} parent=1 // pred_region
      %s13 = ssub.s32 256, 256
      %14 = vsyncadd [#allocation3], %s13
      %s15 = sshll.u32 [#allocation2], 4
      %s16 = int_to_ptr.vmem [resolvable:$true] %s15
      %21 = dma.hbm_to_vmem [thread:$0]  %s0, 256, %s16, [#allocation3], 128, 128, 8
    $region5: #{tpu_custom_call.1} parent=1 // pred_fallthru
      _
    // Predicated region
    $region6: #{tpu_custom_call.1} parent=1 // pred_check
      _
    $region7: #{tpu_custom_call.1} parent=1 // pred_check_branch
      %23 = sbr.rel (0) target = $region9
    $region8: #{tpu_custom_call.1} parent=1 // pred_region
      %s25 = ssub.s32 256, 256
      %26 = vsyncadd [#allocation6], %s25
      %s27 = sshll.u32 [#allocation5], 4
      %s28 = int_to_ptr.vmem [resolvable:$true] %s27
      %33 = dma.hbm_to_vmem [thread:$0]  %s1, 256, %s28, [#allocation6], 128, 128, 8
    $region9: #{tpu_custom_call.1} parent=1 // pred_fallthru
      _
    // Predicated region
    $region10: #{tpu_custom_call.1} parent=1 // pred_check
      _
    $region11: #{tpu_custom_call.1} parent=1 // pred_check_branch
      %35 = sbr.rel (0) target = $region13
    $region12: #{tpu_custom_call.1} parent=1 // pred_region
      %36 = dma.done [#allocation3], 256
    $region13: #{tpu_custom_call.1} parent=1 // pred_fallthru
      _
    // Predicated region
    $region14: #{tpu_custom_call.1} parent=1 // pred_check
      _
    $region15: #{tpu_custom_call.1} parent=1 // pred_check_branch
      %38 = sbr.rel (0) target = $region17
    $region16: #{tpu_custom_call.1} parent=1 // pred_region
      %39 = dma.done [#allocation6], 256
    $region17: #{tpu_custom_call.1} parent=1 // pred_fallthru
      _
    %p40 = scmp.eq.s32.totalorder 0, 0
    // Predicated region
    $region18: #{tpu_custom_call.1} parent=1 // pred_check
      %p41 = pneg %p40
    $region19: #{tpu_custom_call.1} parent=1 // pred_check_branch
      %43 = sbr.rel (%p41) target = $region21
    $region20: #{tpu_custom_call.1} parent=1 // pred_region
      %44 = vst [vmem:[#allocation7] sm:$0xff] 0.0
    $region21: #{tpu_custom_call.1} parent=1 // pred_fallthru
      _
    %v45 = vld [vmem:[#allocation2] sm:$0xff]
    %v46 = vld [vmem:[#allocation2 + $0x8] sm:$0xff]
    %v47 = vld [vmem:[#allocation5] sm:$0xff]
    %v48 = vld [vmem:[#allocation5 + $0x8] sm:$0xff]
    %vm49 = vcmp.eq.f32.partialorder %v47, 1.0
    %vm50 = vcmp.eq.f32.partialorder %v48, 1.0
    %v51 = vsel %vm49, -0.25, -0.75
    %v52 = vsel %vm50, -0.25, -0.75
    %v53 = vsub.f32 1.0, %v45
    %v54 = vsub.f32 1.0, %v46
    %v55 = vsel %vm49, %v45, %v53
    %v56 = vsel %vm50, %v46, %v54
    %v57 = vsub.f32 1.0, %v55
    %v58 = vsub.f32 1.0, %v56
    %v59 = vmul.f32 %v57, %v57
    %v60 = vmul.f32 %v58, %v58
    %v61 = vmul.f32 %v51, %v59
    %v62 = vmul.f32 %v52, %v60
    %v63 = vlog2.pop %v55
    %v64 = vmul.f32 %v63, 0.6931472
    %v65 = vlog2.pop %v56
    %v66 = vmul.f32 %v65, 0.6931472
    %v67 = vmul.f32 %v61, %v64
    %v68 = vmul.f32 %v62, %v66
    %v69 = vld [vmem:[#allocation7] sm:$0xff]
    %v70 = vadd.f32 %v67, %v68
    %v71 = vadd.f32 %v69, %v70
    %72 = vst [vmem:[#allocation7] sm:$0xff] %v71
    // Predicated region
    $region22: #{tpu_custom_call.1} parent=1 // pred_check
      _
    $region23: #{tpu_custom_call.1} parent=1 // pred_check_branch
      %74 = sbr.rel (0) target = $region25
    $region24: #{tpu_custom_call.1} parent=1 // pred_region
      %s76 = ssub.s32 128, 128
      %77 = vsyncadd [#allocation4], %s76
      %s79 = sshll.u32 [#allocation7], 4
      %s80 = int_to_ptr.vmem [resolvable:$true] %s79
      %82 = dma.vmem_to_hbm [thread:$0]  %s80, 128, %s2, [#allocation4]
    $region25: #{tpu_custom_call.1} parent=1 // pred_fallthru
      _
    // Predicated region
    $region26: #{tpu_custom_call.1} parent=1 // pred_check
      _
    $region27: #{tpu_custom_call.1} parent=1 // pred_check_branch
      %84 = sbr.rel (0) target = $region29
    $region28: #{tpu_custom_call.1} parent=1 // pred_region
      %85 = dma.done [#allocation4], 128
    $region29: #{tpu_custom_call.1} parent=1 // pred_fallthru
      _
    %86 = vsyncpa [#allocation3], 1
    %87 = vsyncpa [#allocation6], 1
    %88 = vsyncpa [#allocation4], 1

</llo_original>
